<compile_context>
chip_gen: v7x
topology: tpu7x:2x2x1
jax: 0.10.0
libtpu: 0.0.40
codegen_flags: <defaults>
</compile_context>

<pallas_src>
import jax
import jax.numpy as jnp
from jax.experimental import pallas as pl
from jax.experimental.pallas import tpu as pltpu


def _mish(v):
    # mish(v) = v * tanh(softplus(v));  tanh(softplus(v)) = n / (n + 2),
    # with n = e^v (e^v + 2).  Clamp before exp so the un-selected branch of
    # the where() below stays finite (no inf * 0 / NaN).
    vc = jnp.minimum(v, 20.0)
    ev = jnp.exp(vc)
    n = ev * (ev + 2.0)
    d = n + 2.0
    # EUP approx reciprocal (~2^-12 rel err) + one Newton-Raphson refinement
    # (rel err ~6e-8) — cheaper than an exact f32 divide on the VPU.
    r = pl.reciprocal(d, approx=True)
    r = r * (2.0 - d * r)
    t = jnp.where(v > 20.0, jnp.float32(1.0), n * r)
    return v * t


def conv2d_double_mish(x_nchw, weight, bias):
    """x_nchw: (B, Cin, H, W); weight: (Cout, Cin, KH, KW); bias: (Cout,)."""
    B, Cin, H, W = x_nchw.shape
    Cout, _, KH, KW = weight.shape
    OH, OW = H - KH + 1, W - KW + 1
    HW = H * W

    # Channel (K) axis padded to a full f32 sublane group; slot `Cin` holds the
    # ones-channel that carries the bias through tap (0, 0).
    CinP = max(8, ((Cin + 1 + 7) // 8) * 8)
    # Lane-dense output width, and input lane extent padded so every shifted
    # window x[:, s : s + HW_out] (max shift (KH-1)*W + KW-1) stays in bounds.
    s_max = (KH - 1) * W + (KW - 1)
    HW_out = ((HW + 127) // 128) * 128
    HW_ext = ((HW_out + s_max + 127) // 128) * 128

    x_flat = x_nchw.astype(jnp.float32).reshape(B, Cin, HW)
    ones = jnp.ones((B, 1, HW), jnp.float32)
    x_ext = jnp.concatenate([x_flat, ones], axis=1)                 # (B, Cin+1, HW)
    x_pad = jnp.pad(x_ext, ((0, 0), (0, CinP - Cin - 1), (0, HW_ext - HW)))

    # Per-tap weight matrices, tap index t = ki*KW + kj, layout (Cout, CinP).
    w_t = jnp.transpose(weight, (2, 3, 0, 1)).reshape(KH * KW, Cout, Cin)
    w_taps = jnp.zeros((KH * KW, Cout, CinP), jnp.float32)
    w_taps = w_taps.at[:, :, :Cin].set(w_t.astype(jnp.float32))
    w_taps = w_taps.at[0, :, Cin].set(bias.astype(jnp.float32))     # bias via ones-ch

    def kernel(w_ref, x_ref, o_ref):
        # w_ref: (KH*KW, Cout, CinP)   per-tap weights (bias folded in)
        # x_ref: (1, CinP, HW_ext)     one image, channel/lane padded
        # o_ref: (1, Cout, HW_out)     lane-dense output tile
        acc = None
        for ki in range(KH):
            for kj in range(KW):
                s = ki * W + kj
                # Shifted in-VMEM window (the in-kernel im2col "row group").
                xs = x_ref[0, :, pl.ds(s, HW_out)]                  # (CinP, HW_out)
                contrib = jnp.dot(w_ref[ki * KW + kj], xs,
                                  preferred_element_type=jnp.float32)
                acc = contrib if acc is None else acc + contrib
        # Columns outside the valid (OH, OW) conv window hold meaningless but
        # finite values (padded lanes read zeros); the wrapper trims them.
        o_ref[0] = _mish(_mish(acc)).astype(o_ref.dtype)

    out = pl.pallas_call(
        kernel,
        out_shape=jax.ShapeDtypeStruct((B, Cout, HW_out), jnp.float32),
        grid_spec=pltpu.PrefetchScalarGridSpec(
            num_scalar_prefetch=0,
            grid=(B,),
            in_specs=[
                pl.BlockSpec((KH * KW, Cout, CinP), lambda b: (0, 0, 0)),
                pl.BlockSpec((1, CinP, HW_ext), lambda b: (b, 0, 0)),
            ],
            out_specs=pl.BlockSpec((1, Cout, HW_out), lambda b: (b, 0, 0)),
        ),
        compiler_params=pltpu.CompilerParams(
            dimension_semantics=("parallel",)),
    )(w_taps, x_pad)

    # Output is laid out as flat p = oh*W + ow: trim to the valid (OH, OW) window.
    return out[:, :, :HW].reshape(B, Cout, H, W)[:, :, :OH, :OW]


def reference(x_nchw, weight, bias):
    y = jax.lax.conv_general_dilated(
        x_nchw.astype(jnp.float32), weight.astype(jnp.float32),
        window_strides=(1, 1), padding="VALID",
        dimension_numbers=("NCHW", "OIHW", "NCHW"))
    y = y + bias.reshape(1, -1, 1, 1)
    m1 = y * jnp.tanh(jnp.log1p(jnp.exp(y)))
    m2 = m1 * jnp.tanh(jnp.log1p(jnp.exp(m1)))
    return m2


if __name__ == "__main__":
    in_channels, out_channels, kernel_size = 3, 16, 3
    B, H, W = 2, 16, 16

    key = jax.random.PRNGKey(0)
    kx, kw, kb = jax.random.split(key, 3)
    x = jax.random.normal(kx, (B, in_channels, H, W), dtype=jnp.float32)
    # Deterministic synthetic parameters (shapes match nn.Conv2d(3, 16, 3)).
    fan_in = in_channels * kernel_size * kernel_size
    bound = 1.0 / (fan_in ** 0.5)
    weight = jax.random.uniform(
        kw, (out_channels, in_channels, kernel_size, kernel_size),
        minval=-bound, maxval=bound, dtype=jnp.float32)
    bias = jax.random.uniform(
        kb, (out_channels,), minval=-bound, maxval=bound, dtype=jnp.float32)

    y = jax.jit(conv2d_double_mish)(x, weight, bias)
    y = jax.block_until_ready(y)

    y_ref = reference(x, weight, bias)
    assert y.shape == (B, out_channels, H - kernel_size + 1, W - kernel_size + 1)
    assert jnp.allclose(y, y_ref, atol=1e-4, rtol=1e-4), float(
        jnp.max(jnp.abs(y - y_ref)))

    print("KERNEL_OK")
</pallas_src>

<mosaic_0001>
module attributes {stable_mosaic.version = 11 : i64} {
  func.func @kernel(%arg0: i32, %arg1: memref<9x16x8xf32, #tpu.memory_space<vmem>>, %arg2: memref<1x8x384xf32, #tpu.memory_space<vmem>>, %arg3: memref<1x16x256xf32, #tpu.memory_space<vmem>>) attributes {dimension_semantics = [#tpu.dimension_semantics<parallel>], iteration_bounds = array<i64: 2>, scalar_prefetch = 0 : i64, scratch_operands = 0 : i64, tpu.core_type = #tpu.core_type<tc>, window_params = [{pipeline_mode = #tpu.pipeline_mode<synchronous>, transform_indices = @transform_0, window_bounds = array<i64: 9, 16, 8>}, {transform_indices = @transform_1, window_bounds = array<i64: 1, 8, 384>}, {transform_indices = @transform_2, window_bounds = array<i64: 1, 16, 256>}]} {
    %c0 = arith.constant 0 : index
    %c0_0 = arith.constant 0 : index
    %c0_1 = arith.constant 0 : index
    %0 = vector.load %arg2[%c0, %c0_0, %c0_1] : memref<1x8x384xf32, #tpu.memory_space<vmem>>, vector<1x8x256xf32>
    %1 = vector.shape_cast %0 : vector<1x8x256xf32> to vector<8x256xf32>
    %c0_2 = arith.constant 0 : index
    %c0_3 = arith.constant 0 : index
    %c0_4 = arith.constant 0 : index
    %2 = vector.load %arg1[%c0_2, %c0_3, %c0_4] : memref<9x16x8xf32, #tpu.memory_space<vmem>>, vector<1x16x8xf32>
    %3 = vector.shape_cast %2 : vector<1x16x8xf32> to vector<16x8xf32>
    %cst = arith.constant dense<0.000000e+00> : vector<16x256xf32>
    %4 = tpu.matmul %3, %1, %cst {dimension_numbers = #tpu.dot_dimension_numbers<[1], [0], [0], [1], [0, 0, 1, 1], [], []>} : vector<16x8xf32>, vector<8x256xf32>, vector<16x256xf32> -> vector<16x256xf32>
    %c0_5 = arith.constant 0 : index
    %c0_6 = arith.constant 0 : index
    %c1 = arith.constant 1 : index
    %5 = vector.load %arg2[%c0_5, %c0_6, %c1] : memref<1x8x384xf32, #tpu.memory_space<vmem>>, vector<1x8x256xf32>
    %6 = vector.shape_cast %5 : vector<1x8x256xf32> to vector<8x256xf32>
    %c1_7 = arith.constant 1 : index
    %c0_8 = arith.constant 0 : index
    %c0_9 = arith.constant 0 : index
    %7 = vector.load %arg1[%c1_7, %c0_8, %c0_9] : memref<9x16x8xf32, #tpu.memory_space<vmem>>, vector<1x16x8xf32>
    %8 = vector.shape_cast %7 : vector<1x16x8xf32> to vector<16x8xf32>
    %cst_10 = arith.constant dense<0.000000e+00> : vector<16x256xf32>
    %9 = tpu.matmul %8, %6, %cst_10 {dimension_numbers = #tpu.dot_dimension_numbers<[1], [0], [0], [1], [0, 0, 1, 1], [], []>} : vector<16x8xf32>, vector<8x256xf32>, vector<16x256xf32> -> vector<16x256xf32>
    %10 = arith.addf %4, %9 : vector<16x256xf32>
    %c0_11 = arith.constant 0 : index
    %c0_12 = arith.constant 0 : index
    %c2 = arith.constant 2 : index
    %11 = vector.load %arg2[%c0_11, %c0_12, %c2] : memref<1x8x384xf32, #tpu.memory_space<vmem>>, vector<1x8x256xf32>
    %12 = vector.shape_cast %11 : vector<1x8x256xf32> to vector<8x256xf32>
    %c2_13 = arith.constant 2 : index
    %c0_14 = arith.constant 0 : index
    %c0_15 = arith.constant 0 : index
    %13 = vector.load %arg1[%c2_13, %c0_14, %c0_15] : memref<9x16x8xf32, #tpu.memory_space<vmem>>, vector<1x16x8xf32>
    %14 = vector.shape_cast %13 : vector<1x16x8xf32> to vector<16x8xf32>
    %cst_16 = arith.constant dense<0.000000e+00> : vector<16x256xf32>
    %15 = tpu.matmul %14, %12, %cst_16 {dimension_numbers = #tpu.dot_dimension_numbers<[1], [0], [0], [1], [0, 0, 1, 1], [], []>} : vector<16x8xf32>, vector<8x256xf32>, vector<16x256xf32> -> vector<16x256xf32>
    %16 = arith.addf %10, %15 : vector<16x256xf32>
    %c0_17 = arith.constant 0 : index
    %c0_18 = arith.constant 0 : index
    %c16 = arith.constant 16 : index
    %17 = vector.load %arg2[%c0_17, %c0_18, %c16] : memref<1x8x384xf32, #tpu.memory_space<vmem>>, vector<1x8x256xf32>
    %18 = vector.shape_cast %17 : vector<1x8x256xf32> to vector<8x256xf32>
    %c3 = arith.constant 3 : index
    %c0_19 = arith.constant 0 : index
    %c0_20 = arith.constant 0 : index
    %19 = vector.load %arg1[%c3, %c0_19, %c0_20] : memref<9x16x8xf32, #tpu.memory_space<vmem>>, vector<1x16x8xf32>
    %20 = vector.shape_cast %19 : vector<1x16x8xf32> to vector<16x8xf32>
    %cst_21 = arith.constant dense<0.000000e+00> : vector<16x256xf32>
    %21 = tpu.matmul %20, %18, %cst_21 {dimension_numbers = #tpu.dot_dimension_numbers<[1], [0], [0], [1], [0, 0, 1, 1], [], []>} : vector<16x8xf32>, vector<8x256xf32>, vector<16x256xf32> -> vector<16x256xf32>
    %22 = arith.addf %16, %21 : vector<16x256xf32>
    %c0_22 = arith.constant 0 : index
    %c0_23 = arith.constant 0 : index
    %c17 = arith.constant 17 : index
    %23 = vector.load %arg2[%c0_22, %c0_23, %c17] : memref<1x8x384xf32, #tpu.memory_space<vmem>>, vector<1x8x256xf32>
    %24 = vector.shape_cast %23 : vector<1x8x256xf32> to vector<8x256xf32>
    %c4 = arith.constant 4 : index
    %c0_24 = arith.constant 0 : index
    %c0_25 = arith.constant 0 : index
    %25 = vector.load %arg1[%c4, %c0_24, %c0_25] : memref<9x16x8xf32, #tpu.memory_space<vmem>>, vector<1x16x8xf32>
    %26 = vector.shape_cast %25 : vector<1x16x8xf32> to vector<16x8xf32>
    %cst_26 = arith.constant dense<0.000000e+00> : vector<16x256xf32>
    %27 = tpu.matmul %26, %24, %cst_26 {dimension_numbers = #tpu.dot_dimension_numbers<[1], [0], [0], [1], [0, 0, 1, 1], [], []>} : vector<16x8xf32>, vector<8x256xf32>, vector<16x256xf32> -> vector<16x256xf32>
    %28 = arith.addf %22, %27 : vector<16x256xf32>
    %c0_27 = arith.constant 0 : index
    %c0_28 = arith.constant 0 : index
    %c18 = arith.constant 18 : index
    %29 = vector.load %arg2[%c0_27, %c0_28, %c18] : memref<1x8x384xf32, #tpu.memory_space<vmem>>, vector<1x8x256xf32>
    %30 = vector.shape_cast %29 : vector<1x8x256xf32> to vector<8x256xf32>
    %c5 = arith.constant 5 : index
    %c0_29 = arith.constant 0 : index
    %c0_30 = arith.constant 0 : index
    %31 = vector.load %arg1[%c5, %c0_29, %c0_30] : memref<9x16x8xf32, #tpu.memory_space<vmem>>, vector<1x16x8xf32>
    %32 = vector.shape_cast %31 : vector<1x16x8xf32> to vector<16x8xf32>
    %cst_31 = arith.constant dense<0.000000e+00> : vector<16x256xf32>
    %33 = tpu.matmul %32, %30, %cst_31 {dimension_numbers = #tpu.dot_dimension_numbers<[1], [0], [0], [1], [0, 0, 1, 1], [], []>} : vector<16x8xf32>, vector<8x256xf32>, vector<16x256xf32> -> vector<16x256xf32>
    %34 = arith.addf %28, %33 : vector<16x256xf32>
    %c0_32 = arith.constant 0 : index
    %c0_33 = arith.constant 0 : index
    %c32 = arith.constant 32 : index
    %35 = vector.load %arg2[%c0_32, %c0_33, %c32] : memref<1x8x384xf32, #tpu.memory_space<vmem>>, vector<1x8x256xf32>
    %36 = vector.shape_cast %35 : vector<1x8x256xf32> to vector<8x256xf32>
    %c6 = arith.constant 6 : index
    %c0_34 = arith.constant 0 : index
    %c0_35 = arith.constant 0 : index
    %37 = vector.load %arg1[%c6, %c0_34, %c0_35] : memref<9x16x8xf32, #tpu.memory_space<vmem>>, vector<1x16x8xf32>
    %38 = vector.shape_cast %37 : vector<1x16x8xf32> to vector<16x8xf32>
    %cst_36 = arith.constant dense<0.000000e+00> : vector<16x256xf32>
    %39 = tpu.matmul %38, %36, %cst_36 {dimension_numbers = #tpu.dot_dimension_numbers<[1], [0], [0], [1], [0, 0, 1, 1], [], []>} : vector<16x8xf32>, vector<8x256xf32>, vector<16x256xf32> -> vector<16x256xf32>
    %40 = arith.addf %34, %39 : vector<16x256xf32>
    %c0_37 = arith.constant 0 : index
    %c0_38 = arith.constant 0 : index
    %c33 = arith.constant 33 : index
    %41 = vector.load %arg2[%c0_37, %c0_38, %c33] : memref<1x8x384xf32, #tpu.memory_space<vmem>>, vector<1x8x256xf32>
    %42 = vector.shape_cast %41 : vector<1x8x256xf32> to vector<8x256xf32>
    %c7 = arith.constant 7 : index
    %c0_39 = arith.constant 0 : index
    %c0_40 = arith.constant 0 : index
    %43 = vector.load %arg1[%c7, %c0_39, %c0_40] : memref<9x16x8xf32, #tpu.memory_space<vmem>>, vector<1x16x8xf32>
    %44 = vector.shape_cast %43 : vector<1x16x8xf32> to vector<16x8xf32>
    %cst_41 = arith.constant dense<0.000000e+00> : vector<16x256xf32>
    %45 = tpu.matmul %44, %42, %cst_41 {dimension_numbers = #tpu.dot_dimension_numbers<[1], [0], [0], [1], [0, 0, 1, 1], [], []>} : vector<16x8xf32>, vector<8x256xf32>, vector<16x256xf32> -> vector<16x256xf32>
    %46 = arith.addf %40, %45 : vector<16x256xf32>
    %c0_42 = arith.constant 0 : index
    %c0_43 = arith.constant 0 : index
    %c34 = arith.constant 34 : index
    %47 = vector.load %arg2[%c0_42, %c0_43, %c34] : memref<1x8x384xf32, #tpu.memory_space<vmem>>, vector<1x8x256xf32>
    %48 = vector.shape_cast %47 : vector<1x8x256xf32> to vector<8x256xf32>
    %c8 = arith.constant 8 : index
    %c0_44 = arith.constant 0 : index
    %c0_45 = arith.constant 0 : index
    %49 = vector.load %arg1[%c8, %c0_44, %c0_45] : memref<9x16x8xf32, #tpu.memory_space<vmem>>, vector<1x16x8xf32>
    %50 = vector.shape_cast %49 : vector<1x16x8xf32> to vector<16x8xf32>
    %cst_46 = arith.constant dense<0.000000e+00> : vector<16x256xf32>
    %51 = tpu.matmul %50, %48, %cst_46 {dimension_numbers = #tpu.dot_dimension_numbers<[1], [0], [0], [1], [0, 0, 1, 1], [], []>} : vector<16x8xf32>, vector<8x256xf32>, vector<16x256xf32> -> vector<16x256xf32>
    %52 = arith.addf %46, %51 : vector<16x256xf32>
    %cst_47 = arith.constant 2.000000e+01 : f32
    %53 = vector.broadcast %cst_47 : f32 to vector<16x256xf32>
    %54 = arith.minimumf %52, %53 : vector<16x256xf32>
    %55 = math.exp %54 : vector<16x256xf32>
    %cst_48 = arith.constant 2.000000e+00 : f32
    %56 = vector.broadcast %cst_48 : f32 to vector<16x256xf32>
    %57 = arith.addf %55, %56 : vector<16x256xf32>
    %58 = arith.mulf %55, %57 : vector<16x256xf32>
    %cst_49 = arith.constant 2.000000e+00 : f32
    %59 = vector.broadcast %cst_49 : f32 to vector<16x256xf32>
    %60 = arith.addf %58, %59 : vector<16x256xf32>
    %61 = tpu.reciprocal %60 {approx = true} : vector<16x256xf32> -> vector<16x256xf32>
    %62 = arith.mulf %60, %61 : vector<16x256xf32>
    %cst_50 = arith.constant 2.000000e+00 : f32
    %63 = vector.broadcast %cst_50 : f32 to vector<16x256xf32>
    %64 = arith.subf %63, %62 : vector<16x256xf32>
    %65 = arith.mulf %61, %64 : vector<16x256xf32>
    %cst_51 = arith.constant 2.000000e+01 : f32
    %66 = vector.broadcast %cst_51 : f32 to vector<16x256xf32>
    %67 = arith.cmpf ogt, %52, %66 : vector<16x256xf32>
    %68 = arith.mulf %58, %65 : vector<16x256xf32>
    %cst_52 = arith.constant 1.000000e+00 : f32
    %69 = vector.broadcast %cst_52 : f32 to vector<16x256xf32>
    %70 = arith.select %67, %69, %68 : vector<16x256xi1>, vector<16x256xf32>
    %71 = arith.mulf %52, %70 : vector<16x256xf32>
    %cst_53 = arith.constant 2.000000e+01 : f32
    %72 = vector.broadcast %cst_53 : f32 to vector<16x256xf32>
    %73 = arith.minimumf %71, %72 : vector<16x256xf32>
    %74 = math.exp %73 : vector<16x256xf32>
    %cst_54 = arith.constant 2.000000e+00 : f32
    %75 = vector.broadcast %cst_54 : f32 to vector<16x256xf32>
    %76 = arith.addf %74, %75 : vector<16x256xf32>
    %77 = arith.mulf %74, %76 : vector<16x256xf32>
    %cst_55 = arith.constant 2.000000e+00 : f32
    %78 = vector.broadcast %cst_55 : f32 to vector<16x256xf32>
    %79 = arith.addf %77, %78 : vector<16x256xf32>
    %80 = tpu.reciprocal %79 {approx = true} : vector<16x256xf32> -> vector<16x256xf32>
    %81 = arith.mulf %79, %80 : vector<16x256xf32>
    %cst_56 = arith.constant 2.000000e+00 : f32
    %82 = vector.broadcast %cst_56 : f32 to vector<16x256xf32>
    %83 = arith.subf %82, %81 : vector<16x256xf32>
    %84 = arith.mulf %80, %83 : vector<16x256xf32>
    %cst_57 = arith.constant 2.000000e+01 : f32
    %85 = vector.broadcast %cst_57 : f32 to vector<16x256xf32>
    %86 = arith.cmpf ogt, %71, %85 : vector<16x256xf32>
    %87 = arith.mulf %77, %84 : vector<16x256xf32>
    %cst_58 = arith.constant 1.000000e+00 : f32
    %88 = vector.broadcast %cst_58 : f32 to vector<16x256xf32>
    %89 = arith.select %86, %88, %87 : vector<16x256xi1>, vector<16x256xf32>
    %90 = arith.mulf %71, %89 : vector<16x256xf32>
    %c0_59 = arith.constant 0 : index
    %c0_60 = arith.constant 0 : index
    %c0_61 = arith.constant 0 : index
    %91 = vector.load %arg3[%c0_59, %c0_60, %c0_61] : memref<1x16x256xf32, #tpu.memory_space<vmem>>, vector<1x16x256xf32>
    %92 = vector.shape_cast %91 : vector<1x16x256xf32> to vector<16x256xf32>
    %93 = vector.shape_cast %90 : vector<16x256xf32> to vector<1x16x256xf32>
    tpu.vector_store %arg3[%c0_59, %c0_60, %c0_61], %93 {strides = array<i32>} : memref<1x16x256xf32, #tpu.memory_space<vmem>>, vector<1x16x256xf32>,
    return
  }
  func.func @transform_0(%arg0: i32) -> (i32, i32, i32) {
    %c0_i32 = arith.constant 0 : i32
    %c0_i32_0 = arith.constant 0 : i32
    %c0_i32_1 = arith.constant 0 : i32
    %c0_i32_2 = arith.constant 0 : i32
    return %c0_i32, %c0_i32_0, %c0_i32_1 : i32, i32, i32
  }
  func.func @transform_1(%arg0: i32) -> (i32, i32, i32) {
    %c0_i32 = arith.constant 0 : i32
    %c0_i32_0 = arith.constant 0 : i32
    %c0_i32_1 = arith.constant 0 : i32
    return %arg0, %c0_i32, %c0_i32_0 : i32, i32, i32
  }
  func.func @transform_2(%arg0: i32) -> (i32, i32, i32) {
    %c0_i32 = arith.constant 0 : i32
    %c0_i32_0 = arith.constant 0 : i32
    %c0_i32_1 = arith.constant 0 : i32
    return %arg0, %c0_i32, %c0_i32_0 : i32, i32, i32
  }
}

</mosaic_0001>

<llo_original>
// kernel: conv2d_double_mish.1
$region0: #{conv2d_double_mish.1}
  #allocation0 [shape = 'u32[]', space=smem, size = 0x4, offset = 0x4, fixed_abs, tag = 'smem constant byte address 0x4 - core index']
  #allocation1 [shape = 'u32[144,128]{1,0:T(1,128)}', space=vmem, size = 0x12000, scoped, tag = 'internal scratch']
  %s0 = inlined_call_operand.vmem [shape: f32[9,16,8], index: 0, kind: input, shape index: {}]
  %s1 = inlined_call_operand.vmem [shape: f32[2,8,384], index: 1, kind: input, shape index: {}]
  %s2 = inlined_call_operand.vmem [shape: f32[2,16,256], index: 2, kind: output, shape index: {}]
  %s3 = sld [smem:[#allocation0]]
  $region41: #{conv2d_double_mish.1} parent=0
    _
  %s5 = ssub.s32 1, %s3
  %s6 = scalar_select 0, %s5, %s3
  loop: start=0, step=1, limit=4
  $region2: #{conv2d_double_mish.1} parent=0 // loop_pre_header
    _
  $region3: #{conv2d_double_mish.1} parent=0 // loop_header
    %s8 = sphi 0, %s12
    %p9 = scmp.ge.s32.totalorder %s8, 4
    %s16 = sphi 0, %s16
    %s18 = sphi 0, %s16
    %s19 = sphi 0, %s18
    %s33 = sphi 0, %s19
    %s39 = sphi 0, %s41
    %s42 = sphi 0, %s39
    %s43 = sphi 0, %s42
    %s59 = sphi 0, %s43
    %s65 = sphi 0, %s67
    %s68 = sphi 0, %s65
    %s69 = sphi 0, %s68
    %s85 = sphi 0, %s69
  $region4: #{conv2d_double_mish.1} parent=0 // loop_header_branch
    %11 = sbr.rel (%p9) target = $region8
  $region5: #{conv2d_double_mish.1} parent=0 // loop_body
    %s13 = ssub.s32 %s8, 1
    %s14 = ssub.s32 %s8, 2
    %s15 = sadd.s32 %s8, 1
    %s17 = sadd.s32 %s16, 1
    %p20 = scmp.eq.s32.totalorder %s8, 1
    %p21 = scmp.ne.s32.totalorder %s16, %s18
    %p22 = scmp.eq.s32.totalorder %s8, 0
    %p23 = por %p21, %p22
    %p24 = scmp.ne.s32.totalorder %s16, %s18
    %p25 = scmp.eq.s32.totalorder %s13, 1
    %p26 = por %p24, %p25
    %p27 = scmp.ne.s32.totalorder %s18, %s19
    %p28 = scmp.eq.s32.totalorder %s13, 0
    %p29 = por %p27, %p28
    %p30 = scmp.ne.s32.totalorder %s18, %s19
    %p31 = scmp.eq.s32.totalorder %s14, 1
    %p32 = por %p30, %p31
    %p34 = scmp.ne.s32.totalorder %s19, %s33
    %p35 = scmp.eq.s32.totalorder %s14, 0
    %p36 = por %p34, %p35
    %s37 = ssub.s32 %s8, %s15
    %p38 = scmp.eq.s32.totalorder %s37, 0
    %s40 = sadd.s32 %s39, 1
    %s41 = scalar_select %p38, %s39, %s40
    %p44 = pneg %p38
    %p45 = scmp.eq.s32.totalorder %s8, 1
    %p46 = por %p44, %p45
    %p47 = scmp.ne.s32.totalorder %s39, %s42
    %p48 = scmp.eq.s32.totalorder %s8, 0
    %p49 = por %p47, %p48
    %p50 = scmp.ne.s32.totalorder %s39, %s42
    %p51 = scmp.eq.s32.totalorder %s13, 1
    %p52 = por %p50, %p51
    %p53 = scmp.ne.s32.totalorder %s42, %s43
    %p54 = scmp.eq.s32.totalorder %s13, 0
    %p55 = por %p53, %p54
    %p56 = scmp.ne.s32.totalorder %s42, %s43
    %p57 = scmp.eq.s32.totalorder %s14, 1
    %p58 = por %p56, %p57
    %p60 = scmp.ne.s32.totalorder %s43, %s59
    %p61 = scmp.eq.s32.totalorder %s14, 0
    %p62 = por %p60, %p61
    %s63 = ssub.s32 %s8, %s15
    %p64 = scmp.eq.s32.totalorder %s63, 0
    %s66 = sadd.s32 %s65, 1
    %s67 = scalar_select %p64, %s65, %s66
    %p70 = pneg %p64
    %p71 = scmp.eq.s32.totalorder %s8, 1
    %p72 = por %p70, %p71
    %p73 = scmp.ne.s32.totalorder %s65, %s68
    %p74 = scmp.eq.s32.totalorder %s8, 0
    %p75 = por %p73, %p74
    %p76 = scmp.ne.s32.totalorder %s65, %s68
    %p77 = scmp.eq.s32.totalorder %s13, 1
    %p78 = por %p76, %p77
    %p79 = scmp.ne.s32.totalorder %s68, %s69
    %p80 = scmp.eq.s32.totalorder %s13, 0
    %p81 = por %p79, %p80
    %p82 = scmp.ne.s32.totalorder %s68, %s69
    %p83 = scmp.eq.s32.totalorder %s14, 1
    %p84 = por %p82, %p83
    %p86 = scmp.ne.s32.totalorder %s69, %s85
    %p87 = scmp.eq.s32.totalorder %s14, 0
    %p88 = por %p86, %p87
    %p89 = scmp.le.s32.totalorder 1, %s8
    %p90 = scmp.lt.s32.totalorder %s8, 3
    %p91 = pnand %p89, %p90
    %p92 = pneg %p91
    // Predicated region
    $region9: #{conv2d_double_mish.1} parent=5 // pred_check
      _
    $region10: #{conv2d_double_mish.1} parent=5 // pred_check_branch
      %94 = sbr.rel (%p91) target = $region12
    $region11: #{conv2d_double_mish.1} parent=5 // pred_region
      %s95 = ssub.s32 %s8, 1
      // Predicated region
      $region13: #{conv2d_double_mish.1} parent=11 // pred_check
        %p96 = pneg %p29
      $region14: #{conv2d_double_mish.1} parent=11 // pred_check_branch
        %98 = sbr.rel (%p96) target = $region16
      $region15: #{conv2d_double_mish.1} parent=11 // pred_region
        _
      $region16: #{conv2d_double_mish.1} parent=11 // pred_fallthru
        _
    $region12: #{conv2d_double_mish.1} parent=5 // pred_fallthru
      _
    %p99 = scmp.lt.s32.totalorder %s8, 2
    // Predicated region
    $region17: #{conv2d_double_mish.1} parent=5 // pred_check
      %p100 = pneg %p99
    $region18: #{conv2d_double_mish.1} parent=5 // pred_check_branch
      %102 = sbr.rel (%p100) target = $region20
    $region19: #{conv2d_double_mish.1} parent=5 // pred_region
      // Predicated region
      $region21: #{conv2d_double_mish.1} parent=19 // pred_check
        %p103 = pneg %p49
      $region22: #{conv2d_double_mish.1} parent=19 // pred_check_branch
        %105 = sbr.rel (%p103) target = $region24
      $region23: #{conv2d_double_mish.1} parent=19 // pred_region
        %p106 = scmp.lt.s32.totalorder %s8, 1
        %s107 = scalar_select %p106, %s8, 1
        %s108 = smul.addr %s107, 3
        %s109 = smul.addr %s108, 8
        %s110 = scalar_lea.vmem %s1, %s109
      $region24: #{conv2d_double_mish.1} parent=19 // pred_fallthru
        _
    $region20: #{conv2d_double_mish.1} parent=5 // pred_fallthru
      _
    %p111 = scmp.le.s32.totalorder 1, %s8
    %p112 = scmp.lt.s32.totalorder %s8, 3
    %p113 = pnand %p111, %p112
    %p114 = pneg %p113
    // Predicated region
    $region25: #{conv2d_double_mish.1} parent=5 // pred_check
      _
    $region26: #{conv2d_double_mish.1} parent=5 // pred_check_branch
      %116 = sbr.rel (%p113) target = $region28
    $region27: #{conv2d_double_mish.1} parent=5 // pred_region
      %s117 = ssub.s32 %s8, 1
      %p118 = pneg %p29
      %p119 = pneg %p26
      %p120 = scmp.lt.s32.totalorder %s13, 1
      %s121 = scalar_select %p120, %s13, 1
      %s122 = smul.addr %s121, 3
      %s123 = smul.addr %s122, 8
      %s124 = scalar_lea.vmem %s1, %s123
      %p125 = pneg %p55
      %p126 = pneg %p52
      %p127 = pneg %p81
      %p128 = pneg %p78
      %p129 = scmp.lt.s32.totalorder %s13, 1
      %s130 = scalar_select %p129, %s13, 1
      %s131 = smul.addr %s130, 4
      %s132 = smul.addr %s131, 8
      %s133 = scalar_lea.vmem %s2, %s132
      %p134 = scmp.lt.s32.totalorder %s13, 1
      %s135 = scalar_select %p134, %s13, 1
      %s136 = smul.addr %s135, 3
      %s137 = smul.addr %s136, 8
      %s138 = scalar_lea.vmem %s1, %s137
      %p139 = scmp.lt.s32.totalorder %s13, 1
      %s140 = scalar_select %p139, %s13, 1
      %s141 = smul.addr %s140, 4
      %s142 = smul.addr %s141, 8
      %s143 = scalar_lea.vmem %s2, %s142
      %v144 = vld [vmem:[%s138] sm:$0xff]
      %v145 = vld [vmem:[%s138 + $0x8] sm:$0xff]
      %v146 = vld [vmem:[%s0] sm:$0xff]
      %v147 = vld [vmem:[%s0 + $0x8] sm:$0xff]
      %v148 = vld [vmem:[%s138] sm:$0xff]
      %v149 = vld [vmem:[%s138 + $0x8] sm:$0xff]
      %v150 = vld [vmem:[%s138 + $0x10] sm:$0xff]
      %s151 = scalar_lea.vmem %s0, 16
      %v152 = vld [vmem:[%s151] sm:$0xff]
      %v153 = vld [vmem:[%s151 + $0x8] sm:$0xff]
      %157 = vrot.lane.b32.xlu0 %v148, 127
      %v158 = vpop.permute.xlu0 %157
      %159 = vrot.lane.b32.xlu0 %v149, 127
      %v160 = vpop.permute.xlu0 %159
      %161 = vrot.lane.b32.xlu0 %v150, 127
      %v162 = vpop.permute.xlu0 %161
      %vm163 = vcmask 1039360
      %v164 = vsel %vm163, %v158, %v160
      %v165 = vsel %vm163, %v160, %v162
      %vm168 = vcmask 64512
      %v170 = vsel %vm168, %v152, 0
      %v173 = vsel %vm168, %v153, 0
      %175 = vmatprep.subr.mxu0 %v165
      %176 = vmatpush1.msra.mxu0 %v164
      %177 = vmatprep.subr.mxu0 0.0
      %178 = vmatpush1.msra.mxu0 0.0
      %179 = vmatprep.subr.mxu0 0.0
      %180 = vmatpush1.msra.mxu0 0.0
      %181 = vmatprep.subr.mxu0 0.0
      %182 = vmatpush1.msra.mxu0 0.0
      %183 = vmatprep.subr.mxu0 0.0
      %184 = vmatpush1.msra.mxu0 0.0
      %185 = vmatprep.subr.mxu0 0.0
      %186 = vmatpush1.msra.mxu0 0.0
      %187 = vmatprep.subr.mxu0 0.0
      %188 = vmatpush1.msra.mxu0 0.0
      %189 = vmatprep.subr.mxu0 0.0
      %190 = vmatpush1.msra.mxu0 0.0
      %191 = vmatprep.subr.mxu0 0.0
      %192 = vmatpush1.msra.mxu0 0.0
      %193 = vmatprep.subr.mxu0 0.0
      %194 = vmatpush1.msra.mxu0 0.0
      %195 = vmatprep.subr.mxu0 0.0
      %196 = vmatpush1.msra.mxu0 0.0
      %197 = vmatprep.subr.mxu0 0.0
      %198 = vmatpush1.msra.mxu0 0.0
      %199 = vmatprep.subr.mxu0 0.0
      %200 = vmatpush1.msra.mxu0 0.0
      %201 = vmatprep.subr.mxu0 0.0
      %202 = vmatpush1.msra.mxu0 0.0
      %203 = vmatprep.subr.mxu0 0.0
      %204 = vmatpush1.msra.mxu0 0.0
      %205 = vmatprep.subr.mxu0 0.0
      %206 = vmatpush1.msra.mxu0 0.0
      %207 = vmatprep.subr.mxu0 0.0
      %208 = vmatpush1.msra.mxu0 0.0
      %209 = vmatprep.subr.mxu0 0.0
      %210 = vmatpush1.msra.mxu0 0.0
      %211 = vmatprep.subr.mxu0 0.0
      %212 = vmatpush1.msra.mxu0 0.0
      %213 = vmatprep.subr.mxu0 0.0
      %214 = vmatpush1.msra.mxu0 0.0
      %215 = vmatprep.subr.mxu0 0.0
      %216 = vmatpush1.msra.mxu0 0.0
      %217 = vmatprep.subr.mxu0 0.0
      %218 = vmatpush1.msra.mxu0 0.0
      %219 = vmatprep.subr.mxu0 0.0
      %220 = vmatpush1.msra.mxu0 0.0
      %221 = vmatprep.subr.mxu0 0.0
      %222 = vmatpush1.msra.mxu0 0.0
      %223 = vmatprep.subr.mxu0 0.0
      %224 = vmatpush1.msra.mxu0 0.0
      %225 = vmatprep.subr.mxu0 0.0
      %226 = vmatpush1.msra.mxu0 0.0
      %227 = vmatprep.subr.mxu0 0.0
      %228 = vmatpush1.msra.mxu0 0.0
      %229 = vmatprep.subr.mxu0 0.0
      %230 = vmatpush1.msra.mxu0 0.0
      %231 = vmatprep.subr.mxu0 0.0
      %232 = vmatpush1.msra.mxu0 0.0
      %233 = vmatprep.subr.mxu0 0.0
      %234 = vmatpush1.msra.mxu0 0.0
      %235 = vmatprep.subr.mxu0 0.0
      %236 = vmatpush1.msra.mxu0 0.0
      %237 = vmatprep.subr.mxu0 0.0
      %238 = vmatpush1.msra.mxu0 0.0
      %239 = vmatprep.mubr.f32.mxu0 0.0
      %240 = vmatmul.mubr.f32.gmra.mrb[0].mxu0 %v170
      %v241 = vpop.f32.mrb[0].mxu0
      %v242 = vadd.f32 0.0, %v241
      %v243 = vpop.f32.mrb[0].mxu0
      %v244 = vadd.f32 0.0, %v243
      %245 = vmatprep.mubr.f32.mxu0 0.0
      %246 = vmatmul.mubr.f32.gmra.mrb[0].mxu0 %v173
      %v247 = vpop.f32.mrb[0].mxu0
      %v248 = vadd.f32 0.0, %v247
      %v249 = vpop.f32.mrb[0].mxu0
      %v250 = vadd.f32 0.0, %v249
      %251 = vdwg.mxu0
      %v253 = vsel %vm168, %v146, 0
      %v256 = vsel %vm168, %v147, 0
      %258 = vmatprep.subr.mxu0 %v145
      %259 = vmatpush1.msra.mxu0 %v144
      %260 = vmatprep.subr.mxu0 0.0
      %261 = vmatpush1.msra.mxu0 0.0
      %262 = vmatprep.subr.mxu0 0.0
      %263 = vmatpush1.msra.mxu0 0.0
      %264 = vmatprep.subr.mxu0 0.0
      %265 = vmatpush1.msra.mxu0 0.0
      %266 = vmatprep.subr.mxu0 0.0
      %267 = vmatpush1.msra.mxu0 0.0
      %268 = vmatprep.subr.mxu0 0.0
      %269 = vmatpush1.msra.mxu0 0.0
      %270 = vmatprep.subr.mxu0 0.0
      %271 = vmatpush1.msra.mxu0 0.0
      %272 = vmatprep.subr.mxu0 0.0
      %273 = vmatpush1.msra.mxu0 0.0
      %274 = vmatprep.subr.mxu0 0.0
      %275 = vmatpush1.msra.mxu0 0.0
      %276 = vmatprep.subr.mxu0 0.0
      %277 = vmatpush1.msra.mxu0 0.0
      %278 = vmatprep.subr.mxu0 0.0
      %279 = vmatpush1.msra.mxu0 0.0
      %280 = vmatprep.subr.mxu0 0.0
      %281 = vmatpush1.msra.mxu0 0.0
      %282 = vmatprep.subr.mxu0 0.0
      %283 = vmatpush1.msra.mxu0 0.0
      %284 = vmatprep.subr.mxu0 0.0
      %285 = vmatpush1.msra.mxu0 0.0
      %286 = vmatprep.subr.mxu0 0.0
      %287 = vmatpush1.msra.mxu0 0.0
      %288 = vmatprep.subr.mxu0 0.0
      %289 = vmatpush1.msra.mxu0 0.0
      %290 = vmatprep.subr.mxu0 0.0
      %291 = vmatpush1.msra.mxu0 0.0
      %292 = vmatprep.subr.mxu0 0.0
      %293 = vmatpush1.msra.mxu0 0.0
      %294 = vmatprep.subr.mxu0 0.0
      %295 = vmatpush1.msra.mxu0 0.0
      %296 = vmatprep.subr.mxu0 0.0
      %297 = vmatpush1.msra.mxu0 0.0
      %298 = vmatprep.subr.mxu0 0.0
      %299 = vmatpush1.msra.mxu0 0.0
      %300 = vmatprep.subr.mxu0 0.0
      %301 = vmatpush1.msra.mxu0 0.0
      %302 = vmatprep.subr.mxu0 0.0
      %303 = vmatpush1.msra.mxu0 0.0
      %304 = vmatprep.subr.mxu0 0.0
      %305 = vmatpush1.msra.mxu0 0.0
      %306 = vmatprep.subr.mxu0 0.0
      %307 = vmatpush1.msra.mxu0 0.0
      %308 = vmatprep.subr.mxu0 0.0
      %309 = vmatpush1.msra.mxu0 0.0
      %310 = vmatprep.subr.mxu0 0.0
      %311 = vmatpush1.msra.mxu0 0.0
      %312 = vmatprep.subr.mxu0 0.0
      %313 = vmatpush1.msra.mxu0 0.0
      %314 = vmatprep.subr.mxu0 0.0
      %315 = vmatpush1.msra.mxu0 0.0
      %316 = vmatprep.subr.mxu0 0.0
      %317 = vmatpush1.msra.mxu0 0.0
      %318 = vmatprep.subr.mxu0 0.0
      %319 = vmatpush1.msra.mxu0 0.0
      %320 = vmatprep.subr.mxu0 0.0
      %321 = vmatpush1.msra.mxu0 0.0
      %322 = vmatprep.mubr.f32.mxu0 0.0
      %323 = vmatmul.mubr.f32.gmra.mrb[0].mxu0 %v253
      %v324 = vpop.f32.mrb[0].mxu0
      %v325 = vadd.f32 %v242, %v324
      %v326 = vpop.f32.mrb[0].mxu0
      %v327 = vadd.f32 %v244, %v326
      %328 = vmatprep.mubr.f32.mxu0 0.0
      %329 = vmatmul.mubr.f32.gmra.mrb[0].mxu0 %v256
      %v330 = vpop.f32.mrb[0].mxu0
      %v331 = vadd.f32 %v248, %v330
      %v332 = vpop.f32.mrb[0].mxu0
      %v333 = vadd.f32 %v250, %v332
      %334 = vdwg.mxu0
      %s335 = scalar_lea.vmem %s0, 32
      %v336 = vld [vmem:[%s335] sm:$0xff]
      %v337 = vld [vmem:[%s335 + $0x8] sm:$0xff]
      %338 = vrot.lane.b32.xlu0 %v148, 126
      %v339 = vpop.permute.xlu0 %338
      %340 = vrot.lane.b32.xlu0 %v149, 126
      %v341 = vpop.permute.xlu0 %340
      %342 = vrot.lane.b32.xlu0 %v150, 126
      %v343 = vpop.permute.xlu0 %342
      %vm344 = vcmask 1031168
      %v345 = vsel %vm344, %v339, %v341
      %v346 = vsel %vm344, %v341, %v343
      %v350 = vsel %vm168, %v336, 0
      %v353 = vsel %vm168, %v337, 0
      %355 = vmatprep.subr.mxu0 %v346
      %356 = vmatpush1.msra.mxu0 %v345
      %357 = vmatprep.subr.mxu0 0.0
      %358 = vmatpush1.msra.mxu0 0.0
      %359 = vmatprep.subr.mxu0 0.0
      %360 = vmatpush1.msra.mxu0 0.0
      %361 = vmatprep.subr.mxu0 0.0
      %362 = vmatpush1.msra.mxu0 0.0
      %363 = vmatprep.subr.mxu0 0.0
      %364 = vmatpush1.msra.mxu0 0.0
      %365 = vmatprep.subr.mxu0 0.0
      %366 = vmatpush1.msra.mxu0 0.0
      %367 = vmatprep.subr.mxu0 0.0
      %368 = vmatpush1.msra.mxu0 0.0
      %369 = vmatprep.subr.mxu0 0.0
      %370 = vmatpush1.msra.mxu0 0.0
      %371 = vmatprep.subr.mxu0 0.0
      %372 = vmatpush1.msra.mxu0 0.0
      %373 = vmatprep.subr.mxu0 0.0
      %374 = vmatpush1.msra.mxu0 0.0
      %375 = vmatprep.subr.mxu0 0.0
      %376 = vmatpush1.msra.mxu0 0.0
      %377 = vmatprep.subr.mxu0 0.0
      %378 = vmatpush1.msra.mxu0 0.0
      %379 = vmatprep.subr.mxu0 0.0
      %380 = vmatpush1.msra.mxu0 0.0
      %381 = vmatprep.subr.mxu0 0.0
      %382 = vmatpush1.msra.mxu0 0.0
      %383 = vmatprep.subr.mxu0 0.0
      %384 = vmatpush1.msra.mxu0 0.0
      %385 = vmatprep.subr.mxu0 0.0
      %386 = vmatpush1.msra.mxu0 0.0
      %387 = vmatprep.subr.mxu0 0.0
      %388 = vmatpush1.msra.mxu0 0.0
      %389 = vmatprep.subr.mxu0 0.0
      %390 = vmatpush1.msra.mxu0 0.0
      %391 = vmatprep.subr.mxu0 0.0
      %392 = vmatpush1.msra.mxu0 0.0
      %393 = vmatprep.subr.mxu0 0.0
      %394 = vmatpush1.msra.mxu0 0.0
      %395 = vmatprep.subr.mxu0 0.0
      %396 = vmatpush1.msra.mxu0 0.0
      %397 = vmatprep.subr.mxu0 0.0
      %398 = vmatpush1.msra.mxu0 0.0
      %399 = vmatprep.subr.mxu0 0.0
      %400 = vmatpush1.msra.mxu0 0.0
      %401 = vmatprep.subr.mxu0 0.0
      %402 = vmatpush1.msra.mxu0 0.0
      %403 = vmatprep.subr.mxu0 0.0
      %404 = vmatpush1.msra.mxu0 0.0
      %405 = vmatprep.subr.mxu0 0.0
      %406 = vmatpush1.msra.mxu0 0.0
      %407 = vmatprep.subr.mxu0 0.0
      %408 = vmatpush1.msra.mxu0 0.0
      %409 = vmatprep.subr.mxu0 0.0
      %410 = vmatpush1.msra.mxu0 0.0
      %411 = vmatprep.subr.mxu0 0.0
      %412 = vmatpush1.msra.mxu0 0.0
      %413 = vmatprep.subr.mxu0 0.0
      %414 = vmatpush1.msra.mxu0 0.0
      %415 = vmatprep.subr.mxu0 0.0
      %416 = vmatpush1.msra.mxu0 0.0
      %417 = vmatprep.subr.mxu0 0.0
      %418 = vmatpush1.msra.mxu0 0.0
      %419 = vmatprep.mubr.f32.mxu0 0.0
      %420 = vmatmul.mubr.f32.gmra.mrb[0].mxu0 %v350
      %v421 = vpop.f32.mrb[0].mxu0
      %v422 = vadd.f32 0.0, %v421
      %v423 = vpop.f32.mrb[0].mxu0
      %v424 = vadd.f32 0.0, %v423
      %425 = vmatprep.mubr.f32.mxu0 0.0
      %426 = vmatmul.mubr.f32.gmra.mrb[0].mxu0 %v353
      %v427 = vpop.f32.mrb[0].mxu0
      %v428 = vadd.f32 0.0, %v427
      %v429 = vpop.f32.mrb[0].mxu0
      %v430 = vadd.f32 0.0, %v429
      %431 = vdwg.mxu0
      %v432 = vadd.f32 %v325, %v422
      %v433 = vadd.f32 %v327, %v424
      %v434 = vadd.f32 %v331, %v428
      %v435 = vadd.f32 %v333, %v430
      %s436 = scalar_lea.vmem %s0, 48
      %v437 = vld [vmem:[%s436] sm:$0xff]
      %v438 = vld [vmem:[%s436 + $0x8] sm:$0xff]
      %439 = vrot.lane.b32.xlu0 %v148, 112
      %v440 = vpop.permute.xlu0 %439
      %441 = vrot.lane.b32.xlu0 %v149, 112
      %v442 = vpop.permute.xlu0 %441
      %443 = vrot.lane.b32.xlu0 %v150, 112
      %v444 = vpop.permute.xlu0 %443
      %vm445 = vcmask 916480
      %v446 = vsel %vm445, %v440, %v442
      %v447 = vsel %vm445, %v442, %v444
      %v451 = vsel %vm168, %v437, 0
      %v454 = vsel %vm168, %v438, 0
      %456 = vmatprep.subr.mxu0 %v447
      %457 = vmatpush1.msra.mxu0 %v446
      %458 = vmatprep.subr.mxu0 0.0
      %459 = vmatpush1.msra.mxu0 0.0
      %460 = vmatprep.subr.mxu0 0.0
      %461 = vmatpush1.msra.mxu0 0.0
      %462 = vmatprep.subr.mxu0 0.0
      %463 = vmatpush1.msra.mxu0 0.0
      %464 = vmatprep.subr.mxu0 0.0
      %465 = vmatpush1.msra.mxu0 0.0
      %466 = vmatprep.subr.mxu0 0.0
      %467 = vmatpush1.msra.mxu0 0.0
      %468 = vmatprep.subr.mxu0 0.0
      %469 = vmatpush1.msra.mxu0 0.0
      %470 = vmatprep.subr.mxu0 0.0
      %471 = vmatpush1.msra.mxu0 0.0
      %472 = vmatprep.subr.mxu0 0.0
      %473 = vmatpush1.msra.mxu0 0.0
      %474 = vmatprep.subr.mxu0 0.0
      %475 = vmatpush1.msra.mxu0 0.0
      %476 = vmatprep.subr.mxu0 0.0
      %477 = vmatpush1.msra.mxu0 0.0
      %478 = vmatprep.subr.mxu0 0.0
      %479 = vmatpush1.msra.mxu0 0.0
      %480 = vmatprep.subr.mxu0 0.0
      %481 = vmatpush1.msra.mxu0 0.0
      %482 = vmatprep.subr.mxu0 0.0
      %483 = vmatpush1.msra.mxu0 0.0
      %484 = vmatprep.subr.mxu0 0.0
      %485 = vmatpush1.msra.mxu0 0.0
      %486 = vmatprep.subr.mxu0 0.0
      %487 = vmatpush1.msra.mxu0 0.0
      %488 = vmatprep.subr.mxu0 0.0
      %489 = vmatpush1.msra.mxu0 0.0
      %490 = vmatprep.subr.mxu0 0.0
      %491 = vmatpush1.msra.mxu0 0.0
      %492 = vmatprep.subr.mxu0 0.0
      %493 = vmatpush1.msra.mxu0 0.0
      %494 = vmatprep.subr.mxu0 0.0
      %495 = vmatpush1.msra.mxu0 0.0
      %496 = vmatprep.subr.mxu0 0.0
      %497 = vmatpush1.msra.mxu0 0.0
      %498 = vmatprep.subr.mxu0 0.0
      %499 = vmatpush1.msra.mxu0 0.0
      %500 = vmatprep.subr.mxu0 0.0
      %501 = vmatpush1.msra.mxu0 0.0
      %502 = vmatprep.subr.mxu0 0.0
      %503 = vmatpush1.msra.mxu0 0.0
      %504 = vmatprep.subr.mxu0 0.0
      %505 = vmatpush1.msra.mxu0 0.0
      %506 = vmatprep.subr.mxu0 0.0
      %507 = vmatpush1.msra.mxu0 0.0
      %508 = vmatprep.subr.mxu0 0.0
      %509 = vmatpush1.msra.mxu0 0.0
      %510 = vmatprep.subr.mxu0 0.0
      %511 = vmatpush1.msra.mxu0 0.0
      %512 = vmatprep.subr.mxu0 0.0
      %513 = vmatpush1.msra.mxu0 0.0
      %514 = vmatprep.subr.mxu0 0.0
      %515 = vmatpush1.msra.mxu0 0.0
      %516 = vmatprep.subr.mxu0 0.0
      %517 = vmatpush1.msra.mxu0 0.0
      %518 = vmatprep.subr.mxu0 0.0
      %519 = vmatpush1.msra.mxu0 0.0
      %520 = vmatprep.mubr.f32.mxu0 0.0
      %521 = vmatmul.mubr.f32.gmra.mrb[0].mxu0 %v451
      %v522 = vpop.f32.mrb[0].mxu0
      %v523 = vadd.f32 0.0, %v522
      %v524 = vpop.f32.mrb[0].mxu0
      %v525 = vadd.f32 0.0, %v524
      %526 = vmatprep.mubr.f32.mxu0 0.0
      %527 = vmatmul.mubr.f32.gmra.mrb[0].mxu0 %v454
      %v528 = vpop.f32.mrb[0].mxu0
      %v529 = vadd.f32 0.0, %v528
      %v530 = vpop.f32.mrb[0].mxu0
      %v531 = vadd.f32 0.0, %v530
      %532 = vdwg.mxu0
      %v533 = vadd.f32 %v432, %v523
      %v534 = vadd.f32 %v433, %v525
      %v535 = vadd.f32 %v434, %v529
      %v536 = vadd.f32 %v435, %v531
      %s537 = scalar_lea.vmem %s0, 64
      %v538 = vld [vmem:[%s537] sm:$0xff]
      %v539 = vld [vmem:[%s537 + $0x8] sm:$0xff]
      %540 = vrot.lane.b32.xlu0 %v148, 111
      %v541 = vpop.permute.xlu0 %540
      %542 = vrot.lane.b32.xlu0 %v149, 111
      %v543 = vpop.permute.xlu0 %542
      %544 = vrot.lane.b32.xlu0 %v150, 111
      %v545 = vpop.permute.xlu0 %544
      %vm546 = vcmask 908288
      %v547 = vsel %vm546, %v541, %v543
      %v548 = vsel %vm546, %v543, %v545
      %v552 = vsel %vm168, %v538, 0
      %v555 = vsel %vm168, %v539, 0
      %557 = vmatprep.subr.mxu0 %v548
      %558 = vmatpush1.msra.mxu0 %v547
      %559 = vmatprep.subr.mxu0 0.0
      %560 = vmatpush1.msra.mxu0 0.0
      %561 = vmatprep.subr.mxu0 0.0
      %562 = vmatpush1.msra.mxu0 0.0
      %563 = vmatprep.subr.mxu0 0.0
      %564 = vmatpush1.msra.mxu0 0.0
      %565 = vmatprep.subr.mxu0 0.0
      %566 = vmatpush1.msra.mxu0 0.0
      %567 = vmatprep.subr.mxu0 0.0
      %568 = vmatpush1.msra.mxu0 0.0
      %569 = vmatprep.subr.mxu0 0.0
      %570 = vmatpush1.msra.mxu0 0.0
      %571 = vmatprep.subr.mxu0 0.0
      %572 = vmatpush1.msra.mxu0 0.0
      %573 = vmatprep.subr.mxu0 0.0
      %574 = vmatpush1.msra.mxu0 0.0
      %575 = vmatprep.subr.mxu0 0.0
      %576 = vmatpush1.msra.mxu0 0.0
      %577 = vmatprep.subr.mxu0 0.0
      %578 = vmatpush1.msra.mxu0 0.0
      %579 = vmatprep.subr.mxu0 0.0
      %580 = vmatpush1.msra.mxu0 0.0
      %581 = vmatprep.subr.mxu0 0.0
      %582 = vmatpush1.msra.mxu0 0.0
      %583 = vmatprep.subr.mxu0 0.0
      %584 = vmatpush1.msra.mxu0 0.0
      %585 = vmatprep.subr.mxu0 0.0
      %586 = vmatpush1.msra.mxu0 0.0
      %587 = vmatprep.subr.mxu0 0.0
      %588 = vmatpush1.msra.mxu0 0.0
      %589 = vmatprep.subr.mxu0 0.0
      %590 = vmatpush1.msra.mxu0 0.0
      %591 = vmatprep.subr.mxu0 0.0
      %592 = vmatpush1.msra.mxu0 0.0
      %593 = vmatprep.subr.mxu0 0.0
      %594 = vmatpush1.msra.mxu0 0.0
      %595 = vmatprep.subr.mxu0 0.0
      %596 = vmatpush1.msra.mxu0 0.0
      %597 = vmatprep.subr.mxu0 0.0
      %598 = vmatpush1.msra.mxu0 0.0
      %599 = vmatprep.subr.mxu0 0.0
      %600 = vmatpush1.msra.mxu0 0.0
      %601 = vmatprep.subr.mxu0 0.0
      %602 = vmatpush1.msra.mxu0 0.0
      %603 = vmatprep.subr.mxu0 0.0
      %604 = vmatpush1.msra.mxu0 0.0
      %605 = vmatprep.subr.mxu0 0.0
      %606 = vmatpush1.msra.mxu0 0.0
      %607 = vmatprep.subr.mxu0 0.0
      %608 = vmatpush1.msra.mxu0 0.0
      %609 = vmatprep.subr.mxu0 0.0
      %610 = vmatpush1.msra.mxu0 0.0
      %611 = vmatprep.subr.mxu0 0.0
      %612 = vmatpush1.msra.mxu0 0.0
      %613 = vmatprep.subr.mxu0 0.0
      %614 = vmatpush1.msra.mxu0 0.0
      %615 = vmatprep.subr.mxu0 0.0
      %616 = vmatpush1.msra.mxu0 0.0
      %617 = vmatprep.subr.mxu0 0.0
      %618 = vmatpush1.msra.mxu0 0.0
      %619 = vmatprep.subr.mxu0 0.0
      %620 = vmatpush1.msra.mxu0 0.0
      %621 = vmatprep.mubr.f32.mxu0 0.0
      %622 = vmatmul.mubr.f32.gmra.mrb[0].mxu0 %v552
      %v623 = vpop.f32.mrb[0].mxu0
      %v624 = vadd.f32 0.0, %v623
      %v625 = vpop.f32.mrb[0].mxu0
      %v626 = vadd.f32 0.0, %v625
      %627 = vmatprep.mubr.f32.mxu0 0.0
      %628 = vmatmul.mubr.f32.gmra.mrb[0].mxu0 %v555
      %v629 = vpop.f32.mrb[0].mxu0
      %v630 = vadd.f32 0.0, %v629
      %v631 = vpop.f32.mrb[0].mxu0
      %v632 = vadd.f32 0.0, %v631
      %633 = vdwg.mxu0
      %v634 = vadd.f32 %v533, %v624
      %v635 = vadd.f32 %v534, %v626
      %v636 = vadd.f32 %v535, %v630
      %v637 = vadd.f32 %v536, %v632
      %s638 = scalar_lea.vmem %s0, 80
      %v639 = vld [vmem:[%s638] sm:$0xff]
      %v640 = vld [vmem:[%s638 + $0x8] sm:$0xff]
      %641 = vrot.lane.b32.xlu0 %v148, 110
      %v642 = vpop.permute.xlu0 %641
      %643 = vrot.lane.b32.xlu0 %v149, 110
      %v644 = vpop.permute.xlu0 %643
      %645 = vrot.lane.b32.xlu0 %v150, 110
      %v646 = vpop.permute.xlu0 %645
      %vm647 = vcmask 900096
      %v648 = vsel %vm647, %v642, %v644
      %v649 = vsel %vm647, %v644, %v646
      %v653 = vsel %vm168, %v639, 0
      %v656 = vsel %vm168, %v640, 0
      %658 = vmatprep.subr.mxu0 %v649
      %659 = vmatpush1.msra.mxu0 %v648
      %660 = vmatprep.subr.mxu0 0.0
      %661 = vmatpush1.msra.mxu0 0.0
      %662 = vmatprep.subr.mxu0 0.0
      %663 = vmatpush1.msra.mxu0 0.0
      %664 = vmatprep.subr.mxu0 0.0
      %665 = vmatpush1.msra.mxu0 0.0
      %666 = vmatprep.subr.mxu0 0.0
      %667 = vmatpush1.msra.mxu0 0.0
      %668 = vmatprep.subr.mxu0 0.0
      %669 = vmatpush1.msra.mxu0 0.0
      %670 = vmatprep.subr.mxu0 0.0
      %671 = vmatpush1.msra.mxu0 0.0
      %672 = vmatprep.subr.mxu0 0.0
      %673 = vmatpush1.msra.mxu0 0.0
      %674 = vmatprep.subr.mxu0 0.0
      %675 = vmatpush1.msra.mxu0 0.0
      %676 = vmatprep.subr.mxu0 0.0
      %677 = vmatpush1.msra.mxu0 0.0
      %678 = vmatprep.subr.mxu0 0.0
      %679 = vmatpush1.msra.mxu0 0.0
      %680 = vmatprep.subr.mxu0 0.0
      %681 = vmatpush1.msra.mxu0 0.0
      %682 = vmatprep.subr.mxu0 0.0
      %683 = vmatpush1.msra.mxu0 0.0
      %684 = vmatprep.subr.mxu0 0.0
      %685 = vmatpush1.msra.mxu0 0.0
      %686 = vmatprep.subr.mxu0 0.0
      %687 = vmatpush1.msra.mxu0 0.0
      %688 = vmatprep.subr.mxu0 0.0
      %689 = vmatpush1.msra.mxu0 0.0
      %690 = vmatprep.subr.mxu0 0.0
      %691 = vmatpush1.msra.mxu0 0.0
      %692 = vmatprep.subr.mxu0 0.0
      %693 = vmatpush1.msra.mxu0 0.0
      %694 = vmatprep.subr.mxu0 0.0
      %695 = vmatpush1.msra.mxu0 0.0
      %696 = vmatprep.subr.mxu0 0.0
      %697 = vmatpush1.msra.mxu0 0.0
      %698 = vmatprep.subr.mxu0 0.0
      %699 = vmatpush1.msra.mxu0 0.0
      %700 = vmatprep.subr.mxu0 0.0
      %701 = vmatpush1.msra.mxu0 0.0
      %702 = vmatprep.subr.mxu0 0.0
      %703 = vmatpush1.msra.mxu0 0.0
      %704 = vmatprep.subr.mxu0 0.0
      %705 = vmatpush1.msra.mxu0 0.0
      %706 = vmatprep.subr.mxu0 0.0
      %707 = vmatpush1.msra.mxu0 0.0
      %708 = vmatprep.subr.mxu0 0.0
      %709 = vmatpush1.msra.mxu0 0.0
      %710 = vmatprep.subr.mxu0 0.0
      %711 = vmatpush1.msra.mxu0 0.0
      %712 = vmatprep.subr.mxu0 0.0
      %713 = vmatpush1.msra.mxu0 0.0
      %714 = vmatprep.subr.mxu0 0.0
      %715 = vmatpush1.msra.mxu0 0.0
      %716 = vmatprep.subr.mxu0 0.0
      %717 = vmatpush1.msra.mxu0 0.0
      %718 = vmatprep.subr.mxu0 0.0
      %719 = vmatpush1.msra.mxu0 0.0
      %720 = vmatprep.subr.mxu0 0.0
      %721 = vmatpush1.msra.mxu0 0.0
      %722 = vmatprep.mubr.f32.mxu0 0.0
      %723 = vmatmul.mubr.f32.gmra.mrb[0].mxu0 %v653
      %v724 = vpop.f32.mrb[0].mxu0
      %v725 = vadd.f32 0.0, %v724
      %v726 = vpop.f32.mrb[0].mxu0
      %v727 = vadd.f32 0.0, %v726
      %728 = vmatprep.mubr.f32.mxu0 0.0
      %729 = vmatmul.mubr.f32.gmra.mrb[0].mxu0 %v656
      %v730 = vpop.f32.mrb[0].mxu0
      %v731 = vadd.f32 0.0, %v730
      %v732 = vpop.f32.mrb[0].mxu0
      %v733 = vadd.f32 0.0, %v732
      %734 = vdwg.mxu0
      %v735 = vadd.f32 %v634, %v725
      %v736 = vadd.f32 %v635, %v727
      %v737 = vadd.f32 %v636, %v731
      %v738 = vadd.f32 %v637, %v733
      %s739 = scalar_lea.vmem %s0, 96
      %v740 = vld [vmem:[%s739] sm:$0xff]
      %v741 = vld [vmem:[%s739 + $0x8] sm:$0xff]
      %742 = vrot.lane.b32.xlu0 %v148, 96
      %v743 = vpop.permute.xlu0 %742
      %744 = vrot.lane.b32.xlu0 %v149, 96
      %v745 = vpop.permute.xlu0 %744
      %746 = vrot.lane.b32.xlu0 %v150, 96
      %v747 = vpop.permute.xlu0 %746
      %vm748 = vcmask 785408
      %v749 = vsel %vm748, %v743, %v745
      %v750 = vsel %vm748, %v745, %v747
      %v754 = vsel %vm168, %v740, 0
      %v757 = vsel %vm168, %v741, 0
      %759 = vmatprep.subr.mxu0 %v750
      %760 = vmatpush1.msra.mxu0 %v749
      %761 = vmatprep.subr.mxu0 0.0
      %762 = vmatpush1.msra.mxu0 0.0
      %763 = vmatprep.subr.mxu0 0.0
      %764 = vmatpush1.msra.mxu0 0.0
      %765 = vmatprep.subr.mxu0 0.0
      %766 = vmatpush1.msra.mxu0 0.0
      %767 = vmatprep.subr.mxu0 0.0
      %768 = vmatpush1.msra.mxu0 0.0
      %769 = vmatprep.subr.mxu0 0.0
      %770 = vmatpush1.msra.mxu0 0.0
      %771 = vmatprep.subr.mxu0 0.0
      %772 = vmatpush1.msra.mxu0 0.0
      %773 = vmatprep.subr.mxu0 0.0
      %774 = vmatpush1.msra.mxu0 0.0
      %775 = vmatprep.subr.mxu0 0.0
      %776 = vmatpush1.msra.mxu0 0.0
      %777 = vmatprep.subr.mxu0 0.0
      %778 = vmatpush1.msra.mxu0 0.0
      %779 = vmatprep.subr.mxu0 0.0
      %780 = vmatpush1.msra.mxu0 0.0
      %781 = vmatprep.subr.mxu0 0.0
      %782 = vmatpush1.msra.mxu0 0.0
      %783 = vmatprep.subr.mxu0 0.0
      %784 = vmatpush1.msra.mxu0 0.0
      %785 = vmatprep.subr.mxu0 0.0
      %786 = vmatpush1.msra.mxu0 0.0
      %787 = vmatprep.subr.mxu0 0.0
      %788 = vmatpush1.msra.mxu0 0.0
      %789 = vmatprep.subr.mxu0 0.0
      %790 = vmatpush1.msra.mxu0 0.0
      %791 = vmatprep.subr.mxu0 0.0
      %792 = vmatpush1.msra.mxu0 0.0
      %793 = vmatprep.subr.mxu0 0.0
      %794 = vmatpush1.msra.mxu0 0.0
      %795 = vmatprep.subr.mxu0 0.0
      %796 = vmatpush1.msra.mxu0 0.0
      %797 = vmatprep.subr.mxu0 0.0
      %798 = vmatpush1.msra.mxu0 0.0
      %799 = vmatprep.subr.mxu0 0.0
      %800 = vmatpush1.msra.mxu0 0.0
      %801 = vmatprep.subr.mxu0 0.0
      %802 = vmatpush1.msra.mxu0 0.0
      %803 = vmatprep.subr.mxu0 0.0
      %804 = vmatpush1.msra.mxu0 0.0
      %805 = vmatprep.subr.mxu0 0.0
      %806 = vmatpush1.msra.mxu0 0.0
      %807 = vmatprep.subr.mxu0 0.0
      %808 = vmatpush1.msra.mxu0 0.0
      %809 = vmatprep.subr.mxu0 0.0
      %810 = vmatpush1.msra.mxu0 0.0
      %811 = vmatprep.subr.mxu0 0.0
      %812 = vmatpush1.msra.mxu0 0.0
      %813 = vmatprep.subr.mxu0 0.0
      %814 = vmatpush1.msra.mxu0 0.0
      %815 = vmatprep.subr.mxu0 0.0
      %816 = vmatpush1.msra.mxu0 0.0
      %817 = vmatprep.subr.mxu0 0.0
      %818 = vmatpush1.msra.mxu0 0.0
      %819 = vmatprep.subr.mxu0 0.0
      %820 = vmatpush1.msra.mxu0 0.0
      %821 = vmatprep.subr.mxu0 0.0
      %822 = vmatpush1.msra.mxu0 0.0
      %823 = vmatprep.mubr.f32.mxu0 0.0
      %824 = vmatmul.mubr.f32.gmra.mrb[0].mxu0 %v754
      %v825 = vpop.f32.mrb[0].mxu0
      %v826 = vadd.f32 0.0, %v825
      %v827 = vpop.f32.mrb[0].mxu0
      %v828 = vadd.f32 0.0, %v827
      %829 = vmatprep.mubr.f32.mxu0 0.0
      %830 = vmatmul.mubr.f32.gmra.mrb[0].mxu0 %v757
      %v831 = vpop.f32.mrb[0].mxu0
      %v832 = vadd.f32 0.0, %v831
      %v833 = vpop.f32.mrb[0].mxu0
      %v834 = vadd.f32 0.0, %v833
      %835 = vdwg.mxu0
      %v836 = vadd.f32 %v735, %v826
      %v837 = vadd.f32 %v736, %v828
      %v838 = vadd.f32 %v737, %v832
      %v839 = vadd.f32 %v738, %v834
      %s840 = scalar_lea.vmem %s0, 112
      %v841 = vld [vmem:[%s840] sm:$0xff]
      %v842 = vld [vmem:[%s840 + $0x8] sm:$0xff]
      %843 = vrot.lane.b32.xlu0 %v148, 95
      %v844 = vpop.permute.xlu0 %843
      %845 = vrot.lane.b32.xlu0 %v149, 95
      %v846 = vpop.permute.xlu0 %845
      %847 = vrot.lane.b32.xlu0 %v150, 95
      %v848 = vpop.permute.xlu0 %847
      %vm849 = vcmask 777216
      %v850 = vsel %vm849, %v844, %v846
      %v851 = vsel %vm849, %v846, %v848
      %v855 = vsel %vm168, %v841, 0
      %v858 = vsel %vm168, %v842, 0
      %860 = vmatprep.subr.mxu0 %v851
      %861 = vmatpush1.msra.mxu0 %v850
      %862 = vmatprep.subr.mxu0 0.0
      %863 = vmatpush1.msra.mxu0 0.0
      %864 = vmatprep.subr.mxu0 0.0
      %865 = vmatpush1.msra.mxu0 0.0
      %866 = vmatprep.subr.mxu0 0.0
      %867 = vmatpush1.msra.mxu0 0.0
      %868 = vmatprep.subr.mxu0 0.0
      %869 = vmatpush1.msra.mxu0 0.0
      %870 = vmatprep.subr.mxu0 0.0
      %871 = vmatpush1.msra.mxu0 0.0
      %872 = vmatprep.subr.mxu0 0.0
      %873 = vmatpush1.msra.mxu0 0.0
      %874 = vmatprep.subr.mxu0 0.0
      %875 = vmatpush1.msra.mxu0 0.0
      %876 = vmatprep.subr.mxu0 0.0
      %877 = vmatpush1.msra.mxu0 0.0
      %878 = vmatprep.subr.mxu0 0.0
      %879 = vmatpush1.msra.mxu0 0.0
      %880 = vmatprep.subr.mxu0 0.0
      %881 = vmatpush1.msra.mxu0 0.0
      %882 = vmatprep.subr.mxu0 0.0
      %883 = vmatpush1.msra.mxu0 0.0
      %884 = vmatprep.subr.mxu0 0.0
      %885 = vmatpush1.msra.mxu0 0.0
      %886 = vmatprep.subr.mxu0 0.0
      %887 = vmatpush1.msra.mxu0 0.0
      %888 = vmatprep.subr.mxu0 0.0
      %889 = vmatpush1.msra.mxu0 0.0
      %890 = vmatprep.subr.mxu0 0.0
      %891 = vmatpush1.msra.mxu0 0.0
      %892 = vmatprep.subr.mxu0 0.0
      %893 = vmatpush1.msra.mxu0 0.0
      %894 = vmatprep.subr.mxu0 0.0
      %895 = vmatpush1.msra.mxu0 0.0
      %896 = vmatprep.subr.mxu0 0.0
      %897 = vmatpush1.msra.mxu0 0.0
      %898 = vmatprep.subr.mxu0 0.0
      %899 = vmatpush1.msra.mxu0 0.0
      %900 = vmatprep.subr.mxu0 0.0
      %901 = vmatpush1.msra.mxu0 0.0
      %902 = vmatprep.subr.mxu0 0.0
      %903 = vmatpush1.msra.mxu0 0.0
      %904 = vmatprep.subr.mxu0 0.0
      %905 = vmatpush1.msra.mxu0 0.0
      %906 = vmatprep.subr.mxu0 0.0
      %907 = vmatpush1.msra.mxu0 0.0
      %908 = vmatprep.subr.mxu0 0.0
      %909 = vmatpush1.msra.mxu0 0.0
      %910 = vmatprep.subr.mxu0 0.0
      %911 = vmatpush1.msra.mxu0 0.0
      %912 = vmatprep.subr.mxu0 0.0
      %913 = vmatpush1.msra.mxu0 0.0
      %914 = vmatprep.subr.mxu0 0.0
      %915 = vmatpush1.msra.mxu0 0.0
      %916 = vmatprep.subr.mxu0 0.0
      %917 = vmatpush1.msra.mxu0 0.0
      %918 = vmatprep.subr.mxu0 0.0
      %919 = vmatpush1.msra.mxu0 0.0
      %920 = vmatprep.subr.mxu0 0.0
      %921 = vmatpush1.msra.mxu0 0.0
      %922 = vmatprep.subr.mxu0 0.0
      %923 = vmatpush1.msra.mxu0 0.0
      %924 = vmatprep.mubr.f32.mxu0 0.0
      %925 = vmatmul.mubr.f32.gmra.mrb[0].mxu0 %v855
      %v926 = vpop.f32.mrb[0].mxu0
      %v927 = vadd.f32 0.0, %v926
      %v928 = vpop.f32.mrb[0].mxu0
      %v929 = vadd.f32 0.0, %v928
      %930 = vmatprep.mubr.f32.mxu0 0.0
      %931 = vmatmul.mubr.f32.gmra.mrb[0].mxu0 %v858
      %v932 = vpop.f32.mrb[0].mxu0
      %v933 = vadd.f32 0.0, %v932
      %v934 = vpop.f32.mrb[0].mxu0
      %v935 = vadd.f32 0.0, %v934
      %936 = vdwg.mxu0
      %v937 = vadd.f32 %v836, %v927
      %v938 = vadd.f32 %v837, %v929
      %v939 = vadd.f32 %v838, %v933
      %v940 = vadd.f32 %v839, %v935
      %s941 = scalar_lea.vmem %s0, 128
      %v942 = vld [vmem:[%s941] sm:$0xff]
      %v943 = vld [vmem:[%s941 + $0x8] sm:$0xff]
      %944 = vrot.lane.b32.xlu0 %v148, 94
      %v945 = vpop.permute.xlu0 %944
      %946 = vrot.lane.b32.xlu0 %v149, 94
      %v947 = vpop.permute.xlu0 %946
      %948 = vrot.lane.b32.xlu0 %v150, 94
      %v949 = vpop.permute.xlu0 %948
      %vm950 = vcmask 769024
      %v951 = vsel %vm950, %v945, %v947
      %v952 = vsel %vm950, %v947, %v949
      %v956 = vsel %vm168, %v942, 0
      %v959 = vsel %vm168, %v943, 0
      %961 = vmatprep.subr.mxu0 %v952
      %962 = vmatpush1.msra.mxu0 %v951
      %963 = vmatprep.subr.mxu0 0.0
      %964 = vmatpush1.msra.mxu0 0.0
      %965 = vmatprep.subr.mxu0 0.0
      %966 = vmatpush1.msra.mxu0 0.0
      %967 = vmatprep.subr.mxu0 0.0
      %968 = vmatpush1.msra.mxu0 0.0
      %969 = vmatprep.subr.mxu0 0.0
      %970 = vmatpush1.msra.mxu0 0.0
      %971 = vmatprep.subr.mxu0 0.0
      %972 = vmatpush1.msra.mxu0 0.0
      %973 = vmatprep.subr.mxu0 0.0
      %974 = vmatpush1.msra.mxu0 0.0
      %975 = vmatprep.subr.mxu0 0.0
      %976 = vmatpush1.msra.mxu0 0.0
      %977 = vmatprep.subr.mxu0 0.0
      %978 = vmatpush1.msra.mxu0 0.0
      %979 = vmatprep.subr.mxu0 0.0
      %980 = vmatpush1.msra.mxu0 0.0
      %981 = vmatprep.subr.mxu0 0.0
      %982 = vmatpush1.msra.mxu0 0.0
      %983 = vmatprep.subr.mxu0 0.0
      %984 = vmatpush1.msra.mxu0 0.0
      %985 = vmatprep.subr.mxu0 0.0
      %986 = vmatpush1.msra.mxu0 0.0
      %987 = vmatprep.subr.mxu0 0.0
      %988 = vmatpush1.msra.mxu0 0.0
      %989 = vmatprep.subr.mxu0 0.0
      %990 = vmatpush1.msra.mxu0 0.0
      %991 = vmatprep.subr.mxu0 0.0
      %992 = vmatpush1.msra.mxu0 0.0
      %993 = vmatprep.subr.mxu0 0.0
      %994 = vmatpush1.msra.mxu0 0.0
      %995 = vmatprep.subr.mxu0 0.0
      %996 = vmatpush1.msra.mxu0 0.0
      %997 = vmatprep.subr.mxu0 0.0
      %998 = vmatpush1.msra.mxu0 0.0
      %999 = vmatprep.subr.mxu0 0.0
      %1000 = vmatpush1.msra.mxu0 0.0
      %1001 = vmatprep.subr.mxu0 0.0
      %1002 = vmatpush1.msra.mxu0 0.0
      %1003 = vmatprep.subr.mxu0 0.0
      %1004 = vmatpush1.msra.mxu0 0.0
      %1005 = vmatprep.subr.mxu0 0.0
      %1006 = vmatpush1.msra.mxu0 0.0
      %1007 = vmatprep.subr.mxu0 0.0
      %1008 = vmatpush1.msra.mxu0 0.0
      %1009 = vmatprep.subr.mxu0 0.0
      %1010 = vmatpush1.msra.mxu0 0.0
      %1011 = vmatprep.subr.mxu0 0.0
      %1012 = vmatpush1.msra.mxu0 0.0
      %1013 = vmatprep.subr.mxu0 0.0
      %1014 = vmatpush1.msra.mxu0 0.0
      %1015 = vmatprep.subr.mxu0 0.0
      %1016 = vmatpush1.msra.mxu0 0.0
      %1017 = vmatprep.subr.mxu0 0.0
      %1018 = vmatpush1.msra.mxu0 0.0
      %1019 = vmatprep.subr.mxu0 0.0
      %1020 = vmatpush1.msra.mxu0 0.0
      %1021 = vmatprep.subr.mxu0 0.0
      %1022 = vmatpush1.msra.mxu0 0.0
      %1023 = vmatprep.subr.mxu0 0.0
      %1024 = vmatpush1.msra.mxu0 0.0
      %1025 = vmatprep.mubr.f32.mxu0 0.0
      %1026 = vmatmul.mubr.f32.gmra.mrb[0].mxu0 %v956
      %v1027 = vpop.f32.mrb[0].mxu0
      %v1028 = vadd.f32 0.0, %v1027
      %v1029 = vpop.f32.mrb[0].mxu0
      %v1030 = vadd.f32 0.0, %v1029
      %1031 = vmatprep.mubr.f32.mxu0 0.0
      %1032 = vmatmul.mubr.f32.gmra.mrb[0].mxu0 %v959
      %v1033 = vpop.f32.mrb[0].mxu0
      %v1034 = vadd.f32 0.0, %v1033
      %v1035 = vpop.f32.mrb[0].mxu0
      %v1036 = vadd.f32 0.0, %v1035
      %1037 = vdwg.mxu0
      %v1038 = vadd.f32 %v937, %v1028
      %v1039 = vadd.f32 %v938, %v1030
      %v1040 = vadd.f32 %v939, %v1034
      %v1041 = vadd.f32 %v940, %v1036
      %v1042 = vmin.f32 %v1038, 20.0
      %v1043 = vmin.f32 %v1039, 20.0
      %v1044 = vmin.f32 %v1040, 20.0
      %v1045 = vmin.f32 %v1041, 20.0
      %v1046 = vmul.f32 %v1042, 1.442695
      %v1047 = vpow.pop %v1046
      %v1048 = vmul.f32 %v1043, 1.442695
      %v1049 = vpow.pop %v1048
      %v1050 = vmul.f32 %v1044, 1.442695
      %v1051 = vpow.pop %v1050
      %v1052 = vmul.f32 %v1045, 1.442695
      %v1053 = vpow.pop %v1052
      %v1054 = vadd.f32 %v1047, 2.0
      %v1055 = vadd.f32 %v1049, 2.0
      %v1056 = vadd.f32 %v1051, 2.0
      %v1057 = vadd.f32 %v1053, 2.0
      %v1058 = vmul.f32 %v1047, %v1054
      %v1059 = vmul.f32 %v1049, %v1055
      %v1060 = vmul.f32 %v1051, %v1056
      %v1061 = vmul.f32 %v1053, %v1057
      %v1062 = vadd.f32 %v1058, 2.0
      %v1063 = vadd.f32 %v1059, 2.0
      %v1064 = vadd.f32 %v1060, 2.0
      %v1065 = vadd.f32 %v1061, 2.0
      %v1066 = vrcp.pop %v1062
      %v1067 = vrcp.pop %v1063
      %v1068 = vrcp.pop %v1064
      %v1069 = vrcp.pop %v1065
      %v1070 = vmul.f32 %v1062, %v1066
      %v1071 = vmul.f32 %v1063, %v1067
      %v1072 = vmul.f32 %v1064, %v1068
      %v1073 = vmul.f32 %v1065, %v1069
      %v1074 = vsub.f32 2.0, %v1070
      %v1075 = vsub.f32 2.0, %v1071
      %v1076 = vsub.f32 2.0, %v1072
      %v1077 = vsub.f32 2.0, %v1073
      %v1078 = vmul.f32 %v1066, %v1074
      %v1079 = vmul.f32 %v1067, %v1075
      %v1080 = vmul.f32 %v1068, %v1076
      %v1081 = vmul.f32 %v1069, %v1077
      %vm1082 = vcmp.gt.f32.partialorder %v1038, 20.0
      %vm1083 = vcmp.gt.f32.partialorder %v1039, 20.0
      %vm1084 = vcmp.gt.f32.partialorder %v1040, 20.0
      %vm1085 = vcmp.gt.f32.partialorder %v1041, 20.0
      %v1086 = vmul.f32 %v1058, %v1078
      %v1087 = vmul.f32 %v1059, %v1079
      %v1088 = vmul.f32 %v1060, %v1080
      %v1089 = vmul.f32 %v1061, %v1081
      %v1090 = vsel %vm1082, 1.0, %v1086
      %v1091 = vsel %vm1083, 1.0, %v1087
      %v1092 = vsel %vm1084, 1.0, %v1088
      %v1093 = vsel %vm1085, 1.0, %v1089
      %v1094 = vmul.f32 %v1038, %v1090
      %v1095 = vmul.f32 %v1039, %v1091
      %v1096 = vmul.f32 %v1040, %v1092
      %v1097 = vmul.f32 %v1041, %v1093
      %v1098 = vmin.f32 %v1094, 20.0
      %v1099 = vmin.f32 %v1095, 20.0
      %v1100 = vmin.f32 %v1096, 20.0
      %v1101 = vmin.f32 %v1097, 20.0
      %v1102 = vmul.f32 %v1098, 1.442695
      %v1103 = vpow.pop %v1102
      %v1104 = vmul.f32 %v1099, 1.442695
      %v1105 = vpow.pop %v1104
      %v1106 = vmul.f32 %v1100, 1.442695
      %v1107 = vpow.pop %v1106
      %v1108 = vmul.f32 %v1101, 1.442695
      %v1109 = vpow.pop %v1108
      %v1110 = vadd.f32 %v1103, 2.0
      %v1111 = vadd.f32 %v1105, 2.0
      %v1112 = vadd.f32 %v1107, 2.0
      %v1113 = vadd.f32 %v1109, 2.0
      %v1114 = vmul.f32 %v1103, %v1110
      %v1115 = vmul.f32 %v1105, %v1111
      %v1116 = vmul.f32 %v1107, %v1112
      %v1117 = vmul.f32 %v1109, %v1113
      %v1118 = vadd.f32 %v1114, 2.0
      %v1119 = vadd.f32 %v1115, 2.0
      %v1120 = vadd.f32 %v1116, 2.0
      %v1121 = vadd.f32 %v1117, 2.0
      %v1122 = vrcp.pop %v1118
      %v1123 = vrcp.pop %v1119
      %v1124 = vrcp.pop %v1120
      %v1125 = vrcp.pop %v1121
      %v1126 = vmul.f32 %v1118, %v1122
      %v1127 = vmul.f32 %v1119, %v1123
      %v1128 = vmul.f32 %v1120, %v1124
      %v1129 = vmul.f32 %v1121, %v1125
      %v1130 = vsub.f32 2.0, %v1126
      %v1131 = vsub.f32 2.0, %v1127
      %v1132 = vsub.f32 2.0, %v1128
      %v1133 = vsub.f32 2.0, %v1129
      %v1134 = vmul.f32 %v1122, %v1130
      %v1135 = vmul.f32 %v1123, %v1131
      %v1136 = vmul.f32 %v1124, %v1132
      %v1137 = vmul.f32 %v1125, %v1133
      %vm1138 = vcmp.gt.f32.partialorder %v1094, 20.0
      %vm1139 = vcmp.gt.f32.partialorder %v1095, 20.0
      %vm1140 = vcmp.gt.f32.partialorder %v1096, 20.0
      %vm1141 = vcmp.gt.f32.partialorder %v1097, 20.0
      %v1142 = vmul.f32 %v1114, %v1134
      %v1143 = vmul.f32 %v1115, %v1135
      %v1144 = vmul.f32 %v1116, %v1136
      %v1145 = vmul.f32 %v1117, %v1137
      %v1146 = vsel %vm1138, 1.0, %v1142
      %v1147 = vsel %vm1139, 1.0, %v1143
      %v1148 = vsel %vm1140, 1.0, %v1144
      %v1149 = vsel %vm1141, 1.0, %v1145
      %v1150 = vmul.f32 %v1094, %v1146
      %v1151 = vmul.f32 %v1095, %v1147
      %v1152 = vmul.f32 %v1096, %v1148
      %v1153 = vmul.f32 %v1097, %v1149
      %1154 = vst [vmem:[%s143] sm:$0xff] %v1150
      %1155 = vst [vmem:[%s143 + $0x8] sm:$0xff] %v1151
      %1156 = vst [vmem:[%s143 + $0x10] sm:$0xff] %v1152
      %1157 = vst [vmem:[%s143 + $0x18] sm:$0xff] %v1153
      %p1158 = scmp.lt.s32.totalorder %s13, 1
      %s1159 = scalar_select %p1158, %s13, 1
      %s1160 = smul.addr %s1159, 4
      %s1161 = smul.addr %s1160, 8
      %s1162 = scalar_lea.vmem %s2, %s1161
      // Predicated region
      $region29: #{conv2d_double_mish.1} parent=27 // pred_check
        %p1163 = pneg %p78
      $region30: #{conv2d_double_mish.1} parent=27 // pred_check_branch
        %1165 = sbr.rel (%p1163) target = $region32
      $region31: #{conv2d_double_mish.1} parent=27 // pred_region
        _
      $region32: #{conv2d_double_mish.1} parent=27 // pred_fallthru
        _
    $region28: #{conv2d_double_mish.1} parent=5 // pred_fallthru
      _
    %p1166 = scmp.le.s32.totalorder 2, %s8
    // Predicated region
    $region33: #{conv2d_double_mish.1} parent=5 // pred_check
      %p1167 = pneg %p1166
    $region34: #{conv2d_double_mish.1} parent=5 // pred_check_branch
      %1169 = sbr.rel (%p1167) target = $region36
    $region35: #{conv2d_double_mish.1} parent=5 // pred_region
      %s1170 = ssub.s32 %s8, 2
      // Predicated region
      $region37: #{conv2d_double_mish.1} parent=35 // pred_check
        %p1171 = pneg %p84
      $region38: #{conv2d_double_mish.1} parent=35 // pred_check_branch
        %1173 = sbr.rel (%p1171) target = $region40
      $region39: #{conv2d_double_mish.1} parent=35 // pred_region
        %p1174 = scmp.lt.s32.totalorder %s14, 1
        %s1175 = scalar_select %p1174, %s14, 1
        %s1176 = smul.addr %s1175, 4
        %s1177 = smul.addr %s1176, 8
        %s1178 = scalar_lea.vmem %s2, %s1177
      $region40: #{conv2d_double_mish.1} parent=35 // pred_fallthru
        _
    $region36: #{conv2d_double_mish.1} parent=5 // pred_fallthru
      _
  $region6: #{conv2d_double_mish.1} parent=0 // loop_footer
    %s12 = sadd.s32 1, %s8
  $region7: #{conv2d_double_mish.1} parent=0 // loop_footer_branch
    %7 = sbr.rel target = $region3
  $region8: #{conv2d_double_mish.1} parent=0 // loop_exit
    _

</llo_original>
